<compile_context>
chip_gen: v7x
topology: tpu7x:2x2x1
jax: 0.10.0
libtpu: 0.0.40
codegen_flags: <defaults>
</compile_context>

<pallas_src>
import math

import jax
import jax.numpy as jnp
from jax.experimental import pallas as pl
from jax.experimental.pallas import tpu as pltpu

_LANE = 128


def _round_up(x, m):
    return ((x + m - 1) // m) * m


def _pool_bins(T, levels):
    """ceil_mode MaxPool1d (kernel=stride=ceil(T/n)) bins per pyramid level."""
    bounds = []
    for n in levels:
        k = math.ceil(T / n)
        n_out = math.ceil((T - k) / k) + 1
        for i in range(n_out):
            s = i * k
            bounds.append((s, min(s + k, T)))
    return tuple(bounds)


def _tensorcores_per_chip():
    """v7x exposes 2 TensorCores per chip (grid needs >= 2 steps to use both);
    v5e / v6e expose a single TC, where extra grid steps are pure overhead."""
    try:
        kind = jax.devices()[0].device_kind.lower()
    except Exception:
        return 1
    return 2 if ("v7" in kind or "7x" in kind) else 1


def _pick_nb(B, T, n_tc):
    """Batch rows folded into one grid step.

    Fold as many sublane rows per matmul as possible (amortize the ~0.35 us
    per-step fixed cost), capped at 8192 rows so double-buffered input/output
    blocks stay well under the 32 MiB scoped-VMEM default even on v7x (64 MiB
    physical VMEM).  On 2-TC chips keep the grid >= 2 steps so the "parallel"
    grid axis can shard across both cores.
    """
    row_cap = 8192
    nb_cap = max(1, row_cap // max(T, 1))
    if n_tc >= 2 and B >= 2:
        nb = (B + 1) // 2          # grid >= 2 steps -> both TensorCores get work
    else:
        nb = B                     # single TC: grid = 1, no per-step overhead
    return max(1, min(nb, nb_cap))


def _make_kernel(bin_bounds, nb, T, cout):
    def kernel(xcol_ref, wcol_ref, bconv_ref, wf_ref, bf_ref, vec_ref, com_ref):
        kcin = xcol_ref.shape[-1]
        fp = wf_ref.shape[-1]

        # All nb batch rows as one sublane-dense (nb*T, K*Cin) slab.
        xcol = xcol_ref[...].reshape(nb * T, kcin)

        # Conv1d('same') as a single MXU matmul over the im2col columns (the
        # K*Cin contraction is padded internally by Mosaic), plus bias and the
        # exact-f32 residual add: the centre tap occupies columns [0, Cin).
        vec = jnp.dot(xcol, wcol_ref[...], preferred_element_type=jnp.float32)
        vec = vec + bconv_ref[...] + xcol[:, :cout]

        # vec stored at its natural channel width -> 32x fewer HBM writeback
        # bytes than a 128-lane padded slab (HBM-bound regime: bytes win over
        # the narrow masked stores).
        vec_ref[...] = vec.reshape(nb, T, cout).astype(vec_ref.dtype)

        # Linear (Cin -> 30), lane-padded to 128 so the pooled store is a full,
        # unmasked vreg store.
        com = jnp.dot(vec, wf_ref[...], preferred_element_type=jnp.float32)
        com = (com + bf_ref[...]).reshape(nb, T, fp)

        # Pyramid max pooling over time: all 10 static bins reduced in
        # registers, then ONE full-block store (no per-bin masked stores).
        rows = [jnp.max(com[:, s:e, :], axis=1, keepdims=True)
                for (s, e) in bin_bounds]
        com_ref[...] = jnp.concatenate(rows, axis=1).astype(com_ref.dtype)

    return kernel


def block_forward(x, wconv, bconv, wf, bf, levels=(1, 2, 3, 4), out_bins=10, nb=None):
    """x: (B, T, Cin); wconv: (K, Cin, Cout); bconv: (1, Cout); wf: (Cin, F); bf: (1, F)."""
    B, T, Cin = x.shape
    K, Cin2, Cout = wconv.shape
    F = wf.shape[1]
    assert Cin == Cin2 and Cin == Cout, "residual=True requires in_dim == out_dim"
    assert K % 2 == 1, "'same' padding assumed with odd kernel size"
    pad = (K - 1) // 2

    bounds = _pool_bins(T, levels)
    assert len(bounds) == out_bins, (
        f"pyramid levels produce {len(bounds)} bins, expected {out_bins}")

    kcin = K * Cin                     # natural (unpadded) im2col width
    fp = _round_up(F, _LANE)           # lane-dense pooled output width

    if nb is None:
        nb = _pick_nb(B, T, _tensorcores_per_chip())
    b_pad = _round_up(B, nb)
    dtype = x.dtype

    # Wrapper-side im2col along channels at NATURAL width (block last dim ==
    # full array dim is legal, so no 128-lane padding of the activation slab).
    # Centre tap first so x itself occupies columns [0, Cin) of x_col, letting
    # the kernel do the residual add exactly in f32 without a second input.
    taps = [pad] + [k for k in range(K) if k != pad]
    xp = jnp.pad(x, ((0, b_pad - B), (pad, pad), (0, 0)))
    x_col = jnp.concatenate([xp[:, k:k + T, :] for k in taps], axis=-1)   # (b_pad, T, K*Cin)

    # Conv weight in the matching (tap, channel) row order; biases / fnn weight
    # padded only where the output must be lane-dense.
    w_col = jnp.concatenate([wconv[k] for k in taps], axis=0)             # (K*Cin, Cout)
    bconv_p = bconv.reshape(1, Cout)
    wf_p = jnp.pad(wf, ((0, 0), (0, fp - F)))                             # (Cin, fp)
    bf_p = jnp.pad(bf.reshape(1, F), ((0, 0), (0, fp - F)))

    kernel = _make_kernel(bounds, nb, T, Cout)

    # Cost estimate counts the padded slabs actually moved through HBM.
    cost = pl.CostEstimate(
        flops=2 * b_pad * T * (kcin * Cout + Cout * fp),
        transcendentals=0,
        bytes_accessed=4 * (b_pad * T * kcin            # x_col read
                            + kcin * Cout + Cout        # conv weight + bias
                            + Cout * fp + fp            # fnn weight + bias (padded)
                            + b_pad * T * Cout          # vec write (natural width)
                            + b_pad * out_bins * fp),   # pooled write (lane-dense)
    )

    vec_p, com_p = pl.pallas_call(
        kernel,
        out_shape=(
            jax.ShapeDtypeStruct((b_pad, T, Cout), dtype),
            jax.ShapeDtypeStruct((b_pad, out_bins, fp), dtype),
        ),
        grid_spec=pltpu.PrefetchScalarGridSpec(
            num_scalar_prefetch=0,
            grid=(b_pad // nb,),
            in_specs=[
                pl.BlockSpec((nb, T, kcin), lambda b: (b, 0, 0)),   # im2col activations
                # Constant index maps: operands below are fetched once, not per step.
                pl.BlockSpec((kcin, Cout), lambda b: (0, 0)),       # conv weight (tap-major)
                pl.BlockSpec((1, Cout), lambda b: (0, 0)),          # conv bias
                pl.BlockSpec((Cout, fp), lambda b: (0, 0)),         # fnn weight
                pl.BlockSpec((1, fp), lambda b: (0, 0)),            # fnn bias
            ],
            out_specs=[
                pl.BlockSpec((nb, T, Cout), lambda b: (b, 0, 0)),
                pl.BlockSpec((nb, out_bins, fp), lambda b: (b, 0, 0)),
            ],
        ),
        compiler_params=pltpu.CompilerParams(dimension_semantics=("parallel",)),
        cost_estimate=cost,
    )(x_col, w_col, bconv_p, wf_p, bf_p)

    # Slice off batch / lane padding outside the kernel.
    return vec_p[:B], com_p[:B, :, :F]


def _reference(x, wconv, bconv, wf, bf, levels=(1, 2, 3, 4)):
    """Pure-JAX reference (lax conv) for validation."""
    out = jax.lax.conv_general_dilated(
        x, wconv, window_strides=(1,), padding="SAME",
        dimension_numbers=("NWC", "WIO", "NWC"))
    vec = out + bconv[0] + x
    com = vec @ wf + bf[0]
    rows = [jnp.max(com[:, s:e, :], axis=1, keepdims=True)
            for (s, e) in _pool_bins(x.shape[1], levels)]
    return vec, jnp.concatenate(rows, axis=1)


if __name__ == "__main__":
    # Small shapes consistent with the module: in_dim == out_dim (residual conv).
    B, T, C, K, F = 2, 16, 4, 3, 30

    key = jax.random.PRNGKey(0)
    kx, kw1, kb1, kw2, kb2 = jax.random.split(key, 5)

    x = jax.random.normal(kx, (B, T, C), jnp.float32)                 # (B, T, in_dim)
    wconv = jax.random.normal(kw1, (K, C, C), jnp.float32) * 0.1      # (K, Cin, Cout)
    bconv = jax.random.normal(kb1, (1, C), jnp.float32) * 0.1
    wf = jax.random.normal(kw2, (C, F), jnp.float32) * 0.1            # Linear(in_dim, 30)
    bf = jax.random.normal(kb2, (1, F), jnp.float32) * 0.1

    vec, com = block_forward(x, wconv, bconv, wf, bf)
    jax.block_until_ready((vec, com))

    vec_ref, com_ref = _reference(x, wconv, bconv, wf, bf)
    assert vec.shape == (B, T, C) and com.shape == (B, 10, F)
    # tolerance covers f32 summation-order differences between the fused matmuls
    # and the XLA reference; real bugs would show up as O(0.1) errors.
    assert jnp.allclose(vec, vec_ref, atol=1e-4, rtol=1e-4), \
        float(jnp.max(jnp.abs(vec - vec_ref)))
    assert jnp.allclose(com, com_ref, atol=1e-4, rtol=1e-4), \
        float(jnp.max(jnp.abs(com - com_ref)))

    print("KERNEL_OK")
</pallas_src>

<mosaic_0001>
module attributes {stable_mosaic.version = 11 : i64} {
  func.func @kernel(%arg0: i32, %arg1: memref<2x16x12xf32, #tpu.memory_space<vmem>>, %arg2: memref<12x4xf32, #tpu.memory_space<vmem>>, %arg3: memref<1x4xf32, #tpu.memory_space<vmem>>, %arg4: memref<4x128xf32, #tpu.memory_space<vmem>>, %arg5: memref<1x128xf32, #tpu.memory_space<vmem>>, %arg6: memref<2x16x4xf32, #tpu.memory_space<vmem>>, %arg7: memref<2x10x128xf32, #tpu.memory_space<vmem>>) attributes {dimension_semantics = [#tpu.dimension_semantics<parallel>], iteration_bounds = array<i64: 1>, scalar_prefetch = 0 : i64, scratch_operands = 0 : i64, tpu.core_type = #tpu.core_type<tc>, window_params = [{transform_indices = @transform_0, window_bounds = array<i64: 2, 16, 12>}, {pipeline_mode = #tpu.pipeline_mode<synchronous>, transform_indices = @transform_1, window_bounds = array<i64: 12, 4>}, {pipeline_mode = #tpu.pipeline_mode<synchronous>, transform_indices = @transform_2, window_bounds = array<i64: 1, 4>}, {pipeline_mode = #tpu.pipeline_mode<synchronous>, transform_indices = @transform_3, window_bounds = array<i64: 4, 128>}, {pipeline_mode = #tpu.pipeline_mode<synchronous>, transform_indices = @transform_4, window_bounds = array<i64: 1, 128>}, {transform_indices = @transform_5, window_bounds = array<i64: 2, 16, 4>}, {transform_indices = @transform_6, window_bounds = array<i64: 2, 10, 128>}]} {
    %c0 = arith.constant 0 : index
    %c0_0 = arith.constant 0 : index
    %c0_1 = arith.constant 0 : index
    %0 = vector.load %arg1[%c0, %c0_0, %c0_1] : memref<2x16x12xf32, #tpu.memory_space<vmem>>, vector<2x16x12xf32>
    %1 = vector.shape_cast %0 : vector<2x16x12xf32> to vector<32x12xf32>
    %c0_2 = arith.constant 0 : index
    %c0_3 = arith.constant 0 : index
    %2 = vector.load %arg2[%c0_2, %c0_3] : memref<12x4xf32, #tpu.memory_space<vmem>>, vector<12x4xf32>
    %cst = arith.constant dense<0.000000e+00> : vector<32x4xf32>
    %3 = tpu.matmul %1, %2, %cst {dimension_numbers = #tpu.dot_dimension_numbers<[1], [0], [0], [1], [0, 0, 1, 1], [], []>} : vector<32x12xf32>, vector<12x4xf32>, vector<32x4xf32> -> vector<32x4xf32>
    %c0_4 = arith.constant 0 : index
    %c0_5 = arith.constant 0 : index
    %4 = vector.load %arg3[%c0_4, %c0_5] : memref<1x4xf32, #tpu.memory_space<vmem>>, vector<1x4xf32>
    %5 = vector.broadcast %4 : vector<1x4xf32> to vector<32x4xf32>
    %6 = arith.addf %3, %5 : vector<32x4xf32>
    %7 = vector.extract_strided_slice %1 {offsets = [0, 0], sizes = [32, 4], strides = [1, 1]} : vector<32x12xf32> to vector<32x4xf32>
    %8 = arith.addf %6, %7 : vector<32x4xf32>
    %9 = vector.shape_cast %8 : vector<32x4xf32> to vector<2x16x4xf32>
    %c0_6 = arith.constant 0 : index
    %c0_7 = arith.constant 0 : index
    %c0_8 = arith.constant 0 : index
    %10 = vector.load %arg6[%c0_6, %c0_7, %c0_8] : memref<2x16x4xf32, #tpu.memory_space<vmem>>, vector<2x16x4xf32>
    tpu.vector_store %arg6[%c0_6, %c0_7, %c0_8], %9 {strides = array<i32>} : memref<2x16x4xf32, #tpu.memory_space<vmem>>, vector<2x16x4xf32>,
    %c0_9 = arith.constant 0 : index
    %c0_10 = arith.constant 0 : index
    %11 = vector.load %arg4[%c0_9, %c0_10] : memref<4x128xf32, #tpu.memory_space<vmem>>, vector<4x128xf32>
    %cst_11 = arith.constant dense<0.000000e+00> : vector<32x128xf32>
    %12 = tpu.matmul %8, %11, %cst_11 {dimension_numbers = #tpu.dot_dimension_numbers<[1], [0], [0], [1], [0, 0, 1, 1], [], []>} : vector<32x4xf32>, vector<4x128xf32>, vector<32x128xf32> -> vector<32x128xf32>
    %c0_12 = arith.constant 0 : index
    %c0_13 = arith.constant 0 : index
    %13 = vector.load %arg5[%c0_12, %c0_13] : memref<1x128xf32, #tpu.memory_space<vmem>>, vector<1x128xf32>
    %14 = vector.broadcast %13 : vector<1x128xf32> to vector<32x128xf32>
    %15 = arith.addf %12, %14 : vector<32x128xf32>
    %16 = vector.shape_cast %15 : vector<32x128xf32> to vector<2x16x128xf32>
    %cst_14 = arith.constant dense<0xFF800000> : vector<2x128xf32>
    %17 = vector.multi_reduction <maximumf>, %16, %cst_14 [1] : vector<2x16x128xf32> to vector<2x128xf32>
    %18 = vector.shape_cast %17 : vector<2x128xf32> to vector<2x1x128xf32>
    %19 = vector.extract_strided_slice %16 {offsets = [0, 0, 0], sizes = [2, 8, 128], strides = [1, 1, 1]} : vector<2x16x128xf32> to vector<2x8x128xf32>
    %cst_15 = arith.constant dense<0xFF800000> : vector<2x128xf32>
    %20 = vector.multi_reduction <maximumf>, %19, %cst_15 [1] : vector<2x8x128xf32> to vector<2x128xf32>
    %21 = vector.shape_cast %20 : vector<2x128xf32> to vector<2x1x128xf32>
    %22 = vector.extract_strided_slice %16 {offsets = [0, 8, 0], sizes = [2, 8, 128], strides = [1, 1, 1]} : vector<2x16x128xf32> to vector<2x8x128xf32>
    %cst_16 = arith.constant dense<0xFF800000> : vector<2x128xf32>
    %23 = vector.multi_reduction <maximumf>, %22, %cst_16 [1] : vector<2x8x128xf32> to vector<2x128xf32>
    %24 = vector.shape_cast %23 : vector<2x128xf32> to vector<2x1x128xf32>
    %25 = vector.extract_strided_slice %16 {offsets = [0, 0, 0], sizes = [2, 6, 128], strides = [1, 1, 1]} : vector<2x16x128xf32> to vector<2x6x128xf32>
    %cst_17 = arith.constant dense<0xFF800000> : vector<2x128xf32>
    %26 = vector.multi_reduction <maximumf>, %25, %cst_17 [1] : vector<2x6x128xf32> to vector<2x128xf32>
    %27 = vector.shape_cast %26 : vector<2x128xf32> to vector<2x1x128xf32>
    %28 = vector.extract_strided_slice %16 {offsets = [0, 6, 0], sizes = [2, 6, 128], strides = [1, 1, 1]} : vector<2x16x128xf32> to vector<2x6x128xf32>
    %cst_18 = arith.constant dense<0xFF800000> : vector<2x128xf32>
    %29 = vector.multi_reduction <maximumf>, %28, %cst_18 [1] : vector<2x6x128xf32> to vector<2x128xf32>
    %30 = vector.shape_cast %29 : vector<2x128xf32> to vector<2x1x128xf32>
    %31 = vector.extract_strided_slice %16 {offsets = [0, 12, 0], sizes = [2, 4, 128], strides = [1, 1, 1]} : vector<2x16x128xf32> to vector<2x4x128xf32>
    %cst_19 = arith.constant dense<0xFF800000> : vector<2x128xf32>
    %32 = vector.multi_reduction <maximumf>, %31, %cst_19 [1] : vector<2x4x128xf32> to vector<2x128xf32>
    %33 = vector.shape_cast %32 : vector<2x128xf32> to vector<2x1x128xf32>
    %34 = vector.extract_strided_slice %16 {offsets = [0, 0, 0], sizes = [2, 4, 128], strides = [1, 1, 1]} : vector<2x16x128xf32> to vector<2x4x128xf32>
    %cst_20 = arith.constant dense<0xFF800000> : vector<2x128xf32>
    %35 = vector.multi_reduction <maximumf>, %34, %cst_20 [1] : vector<2x4x128xf32> to vector<2x128xf32>
    %36 = vector.shape_cast %35 : vector<2x128xf32> to vector<2x1x128xf32>
    %37 = vector.extract_strided_slice %16 {offsets = [0, 4, 0], sizes = [2, 4, 128], strides = [1, 1, 1]} : vector<2x16x128xf32> to vector<2x4x128xf32>
    %cst_21 = arith.constant dense<0xFF800000> : vector<2x128xf32>
    %38 = vector.multi_reduction <maximumf>, %37, %cst_21 [1] : vector<2x4x128xf32> to vector<2x128xf32>
    %39 = vector.shape_cast %38 : vector<2x128xf32> to vector<2x1x128xf32>
    %40 = vector.extract_strided_slice %16 {offsets = [0, 8, 0], sizes = [2, 4, 128], strides = [1, 1, 1]} : vector<2x16x128xf32> to vector<2x4x128xf32>
    %cst_22 = arith.constant dense<0xFF800000> : vector<2x128xf32>
    %41 = vector.multi_reduction <maximumf>, %40, %cst_22 [1] : vector<2x4x128xf32> to vector<2x128xf32>
    %42 = vector.shape_cast %41 : vector<2x128xf32> to vector<2x1x128xf32>
    %43 = vector.extract_strided_slice %16 {offsets = [0, 12, 0], sizes = [2, 4, 128], strides = [1, 1, 1]} : vector<2x16x128xf32> to vector<2x4x128xf32>
    %cst_23 = arith.constant dense<0xFF800000> : vector<2x128xf32>
    %44 = vector.multi_reduction <maximumf>, %43, %cst_23 [1] : vector<2x4x128xf32> to vector<2x128xf32>
    %45 = vector.shape_cast %44 : vector<2x128xf32> to vector<2x1x128xf32>
    %46 = tpu.concatenate %18, %21, %24, %27, %30, %33, %36, %39, %42, %45 in 1 : vector<2x1x128xf32>, vector<2x1x128xf32>, vector<2x1x128xf32>, vector<2x1x128xf32>, vector<2x1x128xf32>, vector<2x1x128xf32>, vector<2x1x128xf32>, vector<2x1x128xf32>, vector<2x1x128xf32>, vector<2x1x128xf32> -> vector<2x10x128xf32>
    %c0_24 = arith.constant 0 : index
    %c0_25 = arith.constant 0 : index
    %c0_26 = arith.constant 0 : index
    %47 = vector.load %arg7[%c0_24, %c0_25, %c0_26] : memref<2x10x128xf32, #tpu.memory_space<vmem>>, vector<2x10x128xf32>
    tpu.vector_store %arg7[%c0_24, %c0_25, %c0_26], %46 {strides = array<i32>} : memref<2x10x128xf32, #tpu.memory_space<vmem>>, vector<2x10x128xf32>,
    return
  }
  func.func @transform_0(%arg0: i32) -> (i32, i32, i32) {
    %c0_i32 = arith.constant 0 : i32
    %c0_i32_0 = arith.constant 0 : i32
    %c0_i32_1 = arith.constant 0 : i32
    return %arg0, %c0_i32, %c0_i32_0 : i32, i32, i32
  }
  func.func @transform_1(%arg0: i32) -> (i32, i32) {
    %c0_i32 = arith.constant 0 : i32
    %c0_i32_0 = arith.constant 0 : i32
    %c0_i32_1 = arith.constant 0 : i32
    return %c0_i32, %c0_i32_0 : i32, i32
  }
  func.func @transform_2(%arg0: i32) -> (i32, i32) {
    %c0_i32 = arith.constant 0 : i32
    %c0_i32_0 = arith.constant 0 : i32
    %c0_i32_1 = arith.constant 0 : i32
    return %c0_i32, %c0_i32_0 : i32, i32
  }
  func.func @transform_3(%arg0: i32) -> (i32, i32) {
    %c0_i32 = arith.constant 0 : i32
    %c0_i32_0 = arith.constant 0 : i32
    %c0_i32_1 = arith.constant 0 : i32
    return %c0_i32, %c0_i32_0 : i32, i32
  }
  func.func @transform_4(%arg0: i32) -> (i32, i32) {
    %c0_i32 = arith.constant 0 : i32
    %c0_i32_0 = arith.constant 0 : i32
    %c0_i32_1 = arith.constant 0 : i32
    return %c0_i32, %c0_i32_0 : i32, i32
  }
  func.func @transform_5(%arg0: i32) -> (i32, i32, i32) {
    %c0_i32 = arith.constant 0 : i32
    %c0_i32_0 = arith.constant 0 : i32
    %c0_i32_1 = arith.constant 0 : i32
    return %arg0, %c0_i32, %c0_i32_0 : i32, i32, i32
  }
  func.func @transform_6(%arg0: i32) -> (i32, i32, i32) {
    %c0_i32 = arith.constant 0 : i32
    %c0_i32_0 = arith.constant 0 : i32
    %c0_i32_1 = arith.constant 0 : i32
    return %arg0, %c0_i32, %c0_i32_0 : i32, i32, i32
  }
}

</mosaic_0001>

<llo_original>
// kernel: tpu_custom_call.1
$region0: #{tpu_custom_call.1}
  #allocation0 [shape = 'u32[]', space=smem, size = 0x4, offset = 0x4, fixed_abs, tag = 'smem constant byte address 0x4 - core index']
  #allocation1 [shape = 'u32[144,128]{1,0:T(1,128)}', space=vmem, size = 0x12000, scoped, tag = 'internal scratch']
  %s0 = inlined_call_operand.vmem [shape: f32[2,16,12], index: 0, kind: input, shape index: {}]
  %s1 = inlined_call_operand.vmem [shape: f32[12,4], index: 1, kind: input, shape index: {}]
  %s2 = inlined_call_operand.vmem [shape: f32[1,4], index: 2, kind: input, shape index: {}]
  %s3 = inlined_call_operand.vmem [shape: f32[4,128], index: 3, kind: input, shape index: {}]
  %s4 = inlined_call_operand.vmem [shape: f32[1,128], index: 4, kind: input, shape index: {}]
  %s5 = inlined_call_operand.vmem [shape: f32[2,16,4], index: 5, kind: output, shape index: {0}]
  %s6 = inlined_call_operand.vmem [shape: f32[2,10,128], index: 6, kind: output, shape index: {1}]
  %7 = xla_tuple %s5, %s6
  %s8 = sld [smem:[#allocation0]]
  $region38: #{tpu_custom_call.1} parent=0
    _
  %s10 = ssub.s32 1, %s8
  %s11 = scalar_select 0, %s10, %s8
  // Predicated region
  $region2: #{tpu_custom_call.1} parent=0 // pred_check
    _
  $region3: #{tpu_custom_call.1} parent=0 // pred_check_branch
    %13 = sbr.rel (0) target = $region5
  $region4: #{tpu_custom_call.1} parent=0 // pred_region
    _
  $region5: #{tpu_custom_call.1} parent=0 // pred_fallthru
    _
  // Predicated region
  $region6: #{tpu_custom_call.1} parent=0 // pred_check
    _
  $region7: #{tpu_custom_call.1} parent=0 // pred_check_branch
    %15 = sbr.rel (0) target = $region9
  $region8: #{tpu_custom_call.1} parent=0 // pred_region
    _
  $region9: #{tpu_custom_call.1} parent=0 // pred_fallthru
    _
  // Predicated region
  $region10: #{tpu_custom_call.1} parent=0 // pred_check
    _
  $region11: #{tpu_custom_call.1} parent=0 // pred_check_branch
    %17 = sbr.rel (0) target = $region13
  $region12: #{tpu_custom_call.1} parent=0 // pred_region
    _
  $region13: #{tpu_custom_call.1} parent=0 // pred_fallthru
    _
  // Predicated region
  $region14: #{tpu_custom_call.1} parent=0 // pred_check
    _
  $region15: #{tpu_custom_call.1} parent=0 // pred_check_branch
    %19 = sbr.rel (0) target = $region17
  $region16: #{tpu_custom_call.1} parent=0 // pred_region
    _
  $region17: #{tpu_custom_call.1} parent=0 // pred_fallthru
    _
  // Predicated region
  $region18: #{tpu_custom_call.1} parent=0 // pred_check
    _
  $region19: #{tpu_custom_call.1} parent=0 // pred_check_branch
    %21 = sbr.rel (0) target = $region21
  $region20: #{tpu_custom_call.1} parent=0 // pred_region
    _
  $region21: #{tpu_custom_call.1} parent=0 // pred_fallthru
    _
  %v22 = vld [vmem:[%s0] sm:$0xff]
  %v23 = vld [vmem:[%s0 + $0x8] sm:$0xff]
  %v24 = vld [vmem:[%s0 + $0x10] sm:$0xff]
  %v25 = vld [vmem:[%s0 + $0x18] sm:$0xff]
  %v26 = vld [vmem:[%s1] sm:$0xff]
  %v27 = vld [vmem:[%s1 + $0x8] sm:$0xf]
  %v28 = vld [vmem:[%s2] sm:$0x1]
  %v30 = vlaneseq
  %v31 = vshrl.u32 %v30, 7
  %v32 = vsub.s32 0, %v31
  %v33 = vrot.slane %v28, %v32
  %vm35 = vcmask 97280
  %v37 = vsel %vm35, %v22, 0
  %v40 = vsel %vm35, %v23, 0
  %v43 = vsel %vm35, %v24, 0
  %v46 = vsel %vm35, %v25, 0
  %vm48 = vcmask 1043456
  %v50 = vsel %vm48, %v27, 0
  %52 = vmatprep.subr.mxu0 0.0
  %53 = vmatpush1.msra.mxu0 %v26
  %54 = vmatprep.subr.mxu0 0.0
  %55 = vmatpush1.msra.mxu0 %v50
  %56 = vmatprep.subr.mxu0 0.0
  %57 = vmatpush1.msra.mxu0 0.0
  %58 = vmatprep.subr.mxu0 0.0
  %59 = vmatpush1.msra.mxu0 0.0
  %60 = vmatprep.subr.mxu0 0.0
  %61 = vmatpush1.msra.mxu0 0.0
  %62 = vmatprep.subr.mxu0 0.0
  %63 = vmatpush1.msra.mxu0 0.0
  %64 = vmatprep.subr.mxu0 0.0
  %65 = vmatpush1.msra.mxu0 0.0
  %66 = vmatprep.subr.mxu0 0.0
  %67 = vmatpush1.msra.mxu0 0.0
  %68 = vmatprep.subr.mxu0 0.0
  %69 = vmatpush1.msra.mxu0 0.0
  %70 = vmatprep.subr.mxu0 0.0
  %71 = vmatpush1.msra.mxu0 0.0
  %72 = vmatprep.subr.mxu0 0.0
  %73 = vmatpush1.msra.mxu0 0.0
  %74 = vmatprep.subr.mxu0 0.0
  %75 = vmatpush1.msra.mxu0 0.0
  %76 = vmatprep.subr.mxu0 0.0
  %77 = vmatpush1.msra.mxu0 0.0
  %78 = vmatprep.subr.mxu0 0.0
  %79 = vmatpush1.msra.mxu0 0.0
  %80 = vmatprep.subr.mxu0 0.0
  %81 = vmatpush1.msra.mxu0 0.0
  %82 = vmatprep.subr.mxu0 0.0
  %83 = vmatpush1.msra.mxu0 0.0
  %84 = vmatprep.subr.mxu0 0.0
  %85 = vmatpush1.msra.mxu0 0.0
  %86 = vmatprep.subr.mxu0 0.0
  %87 = vmatpush1.msra.mxu0 0.0
  %88 = vmatprep.subr.mxu0 0.0
  %89 = vmatpush1.msra.mxu0 0.0
  %90 = vmatprep.subr.mxu0 0.0
  %91 = vmatpush1.msra.mxu0 0.0
  %92 = vmatprep.subr.mxu0 0.0
  %93 = vmatpush1.msra.mxu0 0.0
  %94 = vmatprep.subr.mxu0 0.0
  %95 = vmatpush1.msra.mxu0 0.0
  %96 = vmatprep.subr.mxu0 0.0
  %97 = vmatpush1.msra.mxu0 0.0
  %98 = vmatprep.subr.mxu0 0.0
  %99 = vmatpush1.msra.mxu0 0.0
  %100 = vmatprep.subr.mxu0 0.0
  %101 = vmatpush1.msra.mxu0 0.0
  %102 = vmatprep.subr.mxu0 0.0
  %103 = vmatpush1.msra.mxu0 0.0
  %104 = vmatprep.subr.mxu0 0.0
  %105 = vmatpush1.msra.mxu0 0.0
  %106 = vmatprep.subr.mxu0 0.0
  %107 = vmatpush1.msra.mxu0 0.0
  %108 = vmatprep.subr.mxu0 0.0
  %109 = vmatpush1.msra.mxu0 0.0
  %110 = vmatprep.subr.mxu0 0.0
  %111 = vmatpush1.msra.mxu0 0.0
  %112 = vmatprep.subr.mxu0 0.0
  %113 = vmatpush1.msra.mxu0 0.0
  %114 = vmatprep.subr.mxu0 0.0
  %115 = vmatpush1.msra.mxu0 0.0
  %116 = vmatprep.mubr.f32.mxu0 0.0
  %117 = vmatmul.mubr.f32.gmra.mrb[0].mxu0 %v37
  %v118 = vpop.f32.mrb[0].mxu0
  %v119 = vadd.f32 %v33, %v118
  %v120 = vpop.f32.mrb[0].mxu0
  %121 = vmatprep.mubr.f32.mxu0 0.0
  %122 = vmatmul.mubr.f32.gmra.mrb[0].mxu0 %v40
  %v123 = vpop.f32.mrb[0].mxu0
  %v124 = vadd.f32 %v33, %v123
  %v125 = vpop.f32.mrb[0].mxu0
  %126 = vmatprep.mubr.f32.mxu0 0.0
  %127 = vmatmul.mubr.f32.gmra.mrb[0].mxu0 %v43
  %v128 = vpop.f32.mrb[0].mxu0
  %v129 = vadd.f32 %v33, %v128
  %v130 = vpop.f32.mrb[0].mxu0
  %131 = vmatprep.mubr.f32.mxu0 0.0
  %132 = vmatmul.mubr.f32.gmra.mrb[0].mxu0 %v46
  %v133 = vpop.f32.mrb[0].mxu0
  %v134 = vadd.f32 %v33, %v133
  %v135 = vpop.f32.mrb[0].mxu0
  %136 = vdwg.mxu0
  %v137 = vadd.f32 %v119, %v22
  %v138 = vadd.f32 %v124, %v23
  %v139 = vadd.f32 %v129, %v24
  %v140 = vadd.f32 %v134, %v25
  %vm141 = vcmask 31744
  %142 = vst.msk [vmem:[%s5] sm:$0xff] %vm141, %v137
  %143 = vst.msk [vmem:[%s5 + $0x8] sm:$0xff] %vm141, %v138
  %144 = vst.msk [vmem:[%s5 + $0x10] sm:$0xff] %vm141, %v139
  %145 = vst.msk [vmem:[%s5 + $0x18] sm:$0xff] %vm141, %v140
  %v146 = vld [vmem:[%s3] sm:$0xf]
  %v147 = vld [vmem:[%s4] sm:$0x1]
  %v149 = vlaneseq
  %v150 = vshrl.u32 %v149, 7
  %v151 = vsub.s32 0, %v150
  %v152 = vrot.slane %v147, %v151
  %v155 = vsel %vm141, %v137, 0
  %v158 = vsel %vm141, %v138, 0
  %v161 = vsel %vm141, %v139, 0
  %v164 = vsel %vm141, %v140, 0
  %v167 = vsel %vm48, %v146, 0
  %169 = vmatprep.subr.mxu0 0.0
  %170 = vmatpush1.msra.mxu0 %v167
  %171 = vmatprep.subr.mxu0 0.0
  %172 = vmatpush1.msra.mxu0 0.0
  %173 = vmatprep.subr.mxu0 0.0
  %174 = vmatpush1.msra.mxu0 0.0
  %175 = vmatprep.subr.mxu0 0.0
  %176 = vmatpush1.msra.mxu0 0.0
  %177 = vmatprep.subr.mxu0 0.0
  %178 = vmatpush1.msra.mxu0 0.0
  %179 = vmatprep.subr.mxu0 0.0
  %180 = vmatpush1.msra.mxu0 0.0
  %181 = vmatprep.subr.mxu0 0.0
  %182 = vmatpush1.msra.mxu0 0.0
  %183 = vmatprep.subr.mxu0 0.0
  %184 = vmatpush1.msra.mxu0 0.0
  %185 = vmatprep.subr.mxu0 0.0
  %186 = vmatpush1.msra.mxu0 0.0
  %187 = vmatprep.subr.mxu0 0.0
  %188 = vmatpush1.msra.mxu0 0.0
  %189 = vmatprep.subr.mxu0 0.0
  %190 = vmatpush1.msra.mxu0 0.0
  %191 = vmatprep.subr.mxu0 0.0
  %192 = vmatpush1.msra.mxu0 0.0
  %193 = vmatprep.subr.mxu0 0.0
  %194 = vmatpush1.msra.mxu0 0.0
  %195 = vmatprep.subr.mxu0 0.0
  %196 = vmatpush1.msra.mxu0 0.0
  %197 = vmatprep.subr.mxu0 0.0
  %198 = vmatpush1.msra.mxu0 0.0
  %199 = vmatprep.subr.mxu0 0.0
  %200 = vmatpush1.msra.mxu0 0.0
  %201 = vmatprep.subr.mxu0 0.0
  %202 = vmatpush1.msra.mxu0 0.0
  %203 = vmatprep.subr.mxu0 0.0
  %204 = vmatpush1.msra.mxu0 0.0
  %205 = vmatprep.subr.mxu0 0.0
  %206 = vmatpush1.msra.mxu0 0.0
  %207 = vmatprep.subr.mxu0 0.0
  %208 = vmatpush1.msra.mxu0 0.0
  %209 = vmatprep.subr.mxu0 0.0
  %210 = vmatpush1.msra.mxu0 0.0
  %211 = vmatprep.subr.mxu0 0.0
  %212 = vmatpush1.msra.mxu0 0.0
  %213 = vmatprep.subr.mxu0 0.0
  %214 = vmatpush1.msra.mxu0 0.0
  %215 = vmatprep.subr.mxu0 0.0
  %216 = vmatpush1.msra.mxu0 0.0
  %217 = vmatprep.subr.mxu0 0.0
  %218 = vmatpush1.msra.mxu0 0.0
  %219 = vmatprep.subr.mxu0 0.0
  %220 = vmatpush1.msra.mxu0 0.0
  %221 = vmatprep.subr.mxu0 0.0
  %222 = vmatpush1.msra.mxu0 0.0
  %223 = vmatprep.subr.mxu0 0.0
  %224 = vmatpush1.msra.mxu0 0.0
  %225 = vmatprep.subr.mxu0 0.0
  %226 = vmatpush1.msra.mxu0 0.0
  %227 = vmatprep.subr.mxu0 0.0
  %228 = vmatpush1.msra.mxu0 0.0
  %229 = vmatprep.subr.mxu0 0.0
  %230 = vmatpush1.msra.mxu0 0.0
  %231 = vmatprep.subr.mxu0 0.0
  %232 = vmatpush1.msra.mxu0 0.0
  %233 = vmatprep.mubr.f32.mxu0 0.0
  %234 = vmatmul.mubr.f32.gmra.mrb[0].mxu0 %v155
  %v235 = vpop.f32.mrb[0].mxu0
  %v236 = vadd.f32 %v152, %v235
  %v237 = vpop.f32.mrb[0].mxu0
  %238 = vmatprep.mubr.f32.mxu0 0.0
  %239 = vmatmul.mubr.f32.gmra.mrb[0].mxu0 %v158
  %v240 = vpop.f32.mrb[0].mxu0
  %v241 = vadd.f32 %v152, %v240
  %v242 = vpop.f32.mrb[0].mxu0
  %243 = vmatprep.mubr.f32.mxu0 0.0
  %244 = vmatmul.mubr.f32.gmra.mrb[0].mxu0 %v161
  %v245 = vpop.f32.mrb[0].mxu0
  %v246 = vadd.f32 %v152, %v245
  %v247 = vpop.f32.mrb[0].mxu0
  %248 = vmatprep.mubr.f32.mxu0 0.0
  %249 = vmatmul.mubr.f32.gmra.mrb[0].mxu0 %v164
  %v250 = vpop.f32.mrb[0].mxu0
  %v251 = vadd.f32 %v152, %v250
  %v252 = vpop.f32.mrb[0].mxu0
  %253 = vdwg.mxu0
  %v254 = vmax.f32 %v236, %v241
  %v255 = vrot.slane %v254, 4
  %v256 = vmax.f32 %v254, %v255
  %v257 = vrot.slane %v256, 2
  %v258 = vmax.f32 %v256, %v257
  %v259 = vrot.slane %v258, 1
  %v260 = vmax.f32 %v258, %v259
  %v261 = vmax.f32 %v246, %v251
  %v262 = vrot.slane %v261, 4
  %v263 = vmax.f32 %v261, %v262
  %v264 = vrot.slane %v263, 2
  %v265 = vmax.f32 %v263, %v264
  %v266 = vrot.slane %v265, 1
  %v267 = vmax.f32 %v265, %v266
  %v268 = vrot.slane %v236, 4
  %v269 = vmax.f32 %v236, %v268
  %v270 = vrot.slane %v269, 2
  %v271 = vmax.f32 %v269, %v270
  %v272 = vrot.slane %v271, 1
  %v273 = vmax.f32 %v271, %v272
  %v274 = vrot.slane %v246, 4
  %v275 = vmax.f32 %v246, %v274
  %v276 = vrot.slane %v275, 2
  %v277 = vmax.f32 %v275, %v276
  %v278 = vrot.slane %v277, 1
  %v279 = vmax.f32 %v277, %v278
  %v280 = vrot.slane %v241, 4
  %v281 = vmax.f32 %v241, %v280
  %v282 = vrot.slane %v281, 2
  %v283 = vmax.f32 %v281, %v282
  %v284 = vrot.slane %v283, 1
  %v285 = vmax.f32 %v283, %v284
  %v286 = vrot.slane %v251, 4
  %v287 = vmax.f32 %v251, %v286
  %v288 = vrot.slane %v287, 2
  %v289 = vmax.f32 %v287, %v288
  %v290 = vrot.slane %v289, 1
  %v291 = vmax.f32 %v289, %v290
  %vm292 = vcmask 1045504
  %v293 = vsel %vm292, %v236, -inf
  %v294 = vrot.slane %v293, 4
  %v295 = vmax.f32 %v293, %v294
  %v296 = vrot.slane %v295, 2
  %v297 = vmax.f32 %v295, %v296
  %v298 = vrot.slane %v297, 1
  %v299 = vmax.f32 %v297, %v298
  %v300 = vsel %vm292, %v246, -inf
  %v301 = vrot.slane %v300, 4
  %v302 = vmax.f32 %v300, %v301
  %v303 = vrot.slane %v302, 2
  %v304 = vmax.f32 %v302, %v303
  %v305 = vrot.slane %v304, 1
  %v306 = vmax.f32 %v304, %v305
  %vm307 = vcmask 1047558
  %v308 = vsel %vm307, %v236, -inf
  %v309 = vsel %vm48, %v241, -inf
  %v310 = vmax.f32 %v308, %v309
  %v311 = vrot.slane %v310, 4
  %v312 = vmax.f32 %v310, %v311
  %v313 = vrot.slane %v312, 2
  %v314 = vmax.f32 %v312, %v313
  %v315 = vrot.slane %v314, 1
  %v316 = vmax.f32 %v314, %v315
  %v317 = vsel %vm307, %v246, -inf
  %v318 = vsel %vm48, %v251, -inf
  %v319 = vmax.f32 %v317, %v318
  %v320 = vrot.slane %v319, 4
  %v321 = vmax.f32 %v319, %v320
  %v322 = vrot.slane %v321, 2
  %v323 = vmax.f32 %v321, %v322
  %v324 = vrot.slane %v323, 1
  %v325 = vmax.f32 %v323, %v324
  %vm326 = vcmask 1047556
  %v327 = vsel %vm326, %v241, -inf
  %v328 = vrot.slane %v327, 4
  %v329 = vmax.f32 %v327, %v328
  %v330 = vrot.slane %v329, 2
  %v331 = vmax.f32 %v329, %v330
  %v332 = vrot.slane %v331, 1
  %v333 = vmax.f32 %v331, %v332
  %v334 = vsel %vm326, %v251, -inf
  %v335 = vrot.slane %v334, 4
  %v336 = vmax.f32 %v334, %v335
  %v337 = vrot.slane %v336, 2
  %v338 = vmax.f32 %v336, %v337
  %v339 = vrot.slane %v338, 1
  %v340 = vmax.f32 %v338, %v339
  %v341 = vsel %vm48, %v236, -inf
  %v342 = vrot.slane %v341, 4
  %v343 = vmax.f32 %v341, %v342
  %v344 = vrot.slane %v343, 2
  %v345 = vmax.f32 %v343, %v344
  %v346 = vrot.slane %v345, 1
  %v347 = vmax.f32 %v345, %v346
  %v348 = vsel %vm48, %v246, -inf
  %v349 = vrot.slane %v348, 4
  %v350 = vmax.f32 %v348, %v349
  %v351 = vrot.slane %v350, 2
  %v352 = vmax.f32 %v350, %v351
  %v353 = vrot.slane %v352, 1
  %v354 = vmax.f32 %v352, %v353
  %v355 = vsel %vm326, %v236, -inf
  %v356 = vrot.slane %v355, 4
  %v357 = vmax.f32 %v355, %v356
  %v358 = vrot.slane %v357, 2
  %v359 = vmax.f32 %v357, %v358
  %v360 = vrot.slane %v359, 1
  %v361 = vmax.f32 %v359, %v360
  %v362 = vsel %vm326, %v246, -inf
  %v363 = vrot.slane %v362, 4
  %v364 = vmax.f32 %v362, %v363
  %v365 = vrot.slane %v364, 2
  %v366 = vmax.f32 %v364, %v365
  %v367 = vrot.slane %v366, 1
  %v368 = vmax.f32 %v366, %v367
  %v369 = vrot.slane %v309, 4
  %v370 = vmax.f32 %v309, %v369
  %v371 = vrot.slane %v370, 2
  %v372 = vmax.f32 %v370, %v371
  %v373 = vrot.slane %v372, 1
  %v374 = vmax.f32 %v372, %v373
  %v375 = vrot.slane %v318, 4
  %v376 = vmax.f32 %v318, %v375
  %v377 = vrot.slane %v376, 2
  %v378 = vmax.f32 %v376, %v377
  %v379 = vrot.slane %v378, 1
  %v380 = vmax.f32 %v378, %v379
  %vm381 = vcmask 1040384
  %v382 = vsel %vm381, %v260, %v273
  %v383 = vsel %vm381, %v267, %v279
  %vm384 = vcmask 1041408
  %v385 = vsel %vm384, %v382, %v285
  %v386 = vsel %vm384, %v383, %v291
  %vm387 = vcmask 1042432
  %v388 = vsel %vm387, %v385, %v299
  %v389 = vsel %vm387, %v386, %v306
  %v390 = vsel %vm48, %v388, %v316
  %v391 = vsel %vm48, %v389, %v325
  %vm392 = vcmask 1044480
  %v393 = vsel %vm392, %v390, %v333
  %v394 = vsel %vm392, %v391, %v340
  %v395 = vsel %vm292, %v393, %v347
  %v396 = vsel %vm292, %v394, %v354
  %vm397 = vcmask 1046528
  %v398 = vsel %vm397, %v395, %v361
  %v399 = vsel %vm397, %v396, %v368
  %v400 = vsel %vm381, %v374, %v333
  %v401 = vsel %vm381, %v380, %v340
  %402 = vst [vmem:[%s6] sm:$0xff] %v398
  %403 = vst [vmem:[%s6 + $0x8] sm:$0x3] %v400
  %404 = vst [vmem:[%s6 + $0x10] sm:$0xff] %v399
  %405 = vst [vmem:[%s6 + $0x18] sm:$0x3] %v401
  // Predicated region
  $region22: #{tpu_custom_call.1} parent=0 // pred_check
    _
  $region23: #{tpu_custom_call.1} parent=0 // pred_check_branch
    %407 = sbr.rel (0) target = $region25
  $region24: #{tpu_custom_call.1} parent=0 // pred_region
    _
  $region25: #{tpu_custom_call.1} parent=0 // pred_fallthru
    _
  // Predicated region
  $region26: #{tpu_custom_call.1} parent=0 // pred_check
    _
  $region27: #{tpu_custom_call.1} parent=0 // pred_check_branch
    %409 = sbr.rel (0) target = $region29
  $region28: #{tpu_custom_call.1} parent=0 // pred_region
    _
  $region29: #{tpu_custom_call.1} parent=0 // pred_fallthru
    _
  // Predicated region
  $region30: #{tpu_custom_call.1} parent=0 // pred_check
    _
  $region31: #{tpu_custom_call.1} parent=0 // pred_check_branch
    %411 = sbr.rel (0) target = $region33
  $region32: #{tpu_custom_call.1} parent=0 // pred_region
    _
  $region33: #{tpu_custom_call.1} parent=0 // pred_fallthru
    _
  // Predicated region
  $region34: #{tpu_custom_call.1} parent=0 // pred_check
    _
  $region35: #{tpu_custom_call.1} parent=0 // pred_check_branch
    %413 = sbr.rel (0) target = $region37
  $region36: #{tpu_custom_call.1} parent=0 // pred_region
    _
  $region37: #{tpu_custom_call.1} parent=0 // pred_fallthru
    _

</llo_original>
